<compile_context>
chip_gen: v5e
topology: v5e:2x2
jax: 0.10.0
libtpu: 0.0.40
codegen_flags: <defaults>
</compile_context>

<pallas_src>
import jax
import jax.numpy as jnp
from jax.experimental import pallas as pl
from jax.experimental.pallas import tpu as pltpu

# Small, module-consistent sizes.
B = 2            # batch
T = 8            # sequence length
C_IN = 32        # encoder_embed_dim
H = 32           # var_pred_hidden_dim
K = 3            # var_pred_kernel_size
PAD_L = (K - 1) // 2
BT = B * T
EPS = 1e-5       # LayerNorm eps (torch default)


def _conv1d_same_relu(v, w_ref, bias, rows_mod):
    """'same'-padded conv over batch-stacked rows + bias + ReLU.

    v: (B*T, C) activations; w_ref: (K, C, H) VMEM ref; bias: (1, H).
    K accumulated MXU matmuls (one per tap). Edge taps are built with a full-height
    pltpu.roll (XLU) + per-sequence masks (rows_mod = row % T), so taps never read across
    batch boundaries and no padded intermediate is ever materialized.
    """
    n_rows = v.shape[0]
    acc = None
    for k in range(K):
        d = k - PAD_L                           # this tap reads v[t + d] within a sequence
        if d == 0:
            tap = v
        else:
            shifted = pltpu.roll(v, shift=(-d) % n_rows, axis=0)
            mask = (rows_mod < T - d) if d > 0 else (rows_mod >= -d)
            tap = jnp.where(mask, shifted, 0.0)
        c = jnp.dot(tap, w_ref[k], preferred_element_type=jnp.float32)
        acc = c if acc is None else acc + c
    return jnp.maximum(acc + bias, 0.0)


def variance_predictor_kernel(
    x_ref,        # (B*T, C_IN)   batch-stacked input
    w1_ref,       # (K, C_IN, H)  conv1 weight (tap-major)
    w2_ref,       # (K, H, H)     conv2 weight (tap-major)
    vec_ref,      # (8, H)        packed vectors: [b1, g1, be1, b2, wp'(=g2*wp), pad...]
    sc_ref,       # (2,) SMEM     [bp'(=bp + be2@wp), sum(wp')]
    o_ref,        # (B*T, 1)      output
):
    x = x_ref[...].astype(jnp.float32)                                  # (BT, C_IN)
    rows_mod = jax.lax.broadcasted_iota(jnp.int32, (BT, 1), 0) % T      # per-sequence pos

    b1 = vec_ref[0:1, :]
    g1 = vec_ref[1:2, :]
    be1 = vec_ref[2:3, :]
    b2 = vec_ref[3:4, :]
    wp = vec_ref[4:5, :]
    bp = sc_ref[0]
    swp = sc_ref[1]

    # ---- conv1 ('same') + bias + ReLU ----------------------------------------
    h = _conv1d_same_relu(x, w1_ref, b1, rows_mod)                      # (BT, H)

    # ---- LayerNorm 1 (+affine); dropout_module = identity in eval mode -------
    mu = jnp.mean(h, axis=-1, keepdims=True)
    var = jnp.mean(h * h, axis=-1, keepdims=True) - mu * mu
    h = (h - mu) * jax.lax.rsqrt(var + EPS) * g1 + be1

    # ---- conv2 ('same') + bias + ReLU ----------------------------------------
    h2 = _conv1d_same_relu(h, w2_ref, b2, rows_mod)                     # (BT, H)

    # ---- LayerNorm 2 + proj, fully folded: only per-row scalars, hn never built
    # TODO(synk): FiLM branch (use_film=True) and padding_mask not implemented; module
    # defaults are film=None / padding_mask=None, which are identity.
    mu2 = jnp.mean(h2, axis=-1, keepdims=True)
    var2 = jnp.mean(h2 * h2, axis=-1, keepdims=True) - mu2 * mu2
    dot_wp = jnp.sum(h2 * wp, axis=-1, keepdims=True)
    y = (dot_wp - mu2 * swp) * jax.lax.rsqrt(var2 + EPS) + bp           # (BT, 1)
    o_ref[...] = y.astype(o_ref.dtype)


def variance_predictor_pallas(seqs, params):
    """seqs: (B, T, C_IN) float32 -> (B, T) float32 (eval mode, no mask, no FiLM)."""
    # Conv weights: PyTorch (C_out, C_in, K) -> tap-major (K, C_in, C_out).
    w1 = jnp.transpose(params["w1_oik"], (2, 1, 0))                     # (K, C_IN, H)
    w2 = jnp.transpose(params["w2_oik"], (2, 1, 0))                     # (K, H, H)

    # Fold the LayerNorm-2 affine (and the whole LN2) into the projection:
    #   (hn*g2 + be2) @ wp + bp == hn @ (g2*wp) + (be2 @ wp + bp)
    wp_fold = params["g2"] * params["wp"][:, 0]                         # (H,)
    bp_fold = params["bp"] + params["be2"] @ params["wp"][:, 0]         # scalar

    # Pack the five (H,) vector params into one (8, H) slab: single DMA / single VMEM tile.
    vecpack = jnp.zeros((8, H), jnp.float32)
    vecpack = vecpack.at[0].set(params["b1"])
    vecpack = vecpack.at[1].set(params["g1"])
    vecpack = vecpack.at[2].set(params["be1"])
    vecpack = vecpack.at[3].set(params["b2"])
    vecpack = vecpack.at[4].set(wp_fold)
    scalars = jnp.stack([bp_fold, jnp.sum(wp_fold)]).astype(jnp.float32)  # (2,)

    x2d = seqs.reshape(BT, C_IN)                                        # batch-stacked rows

    # TODO(synk): for production-length sequences, tile T in multiple-of-8 blocks (with
    # conv halo handling), cast MXU operands to bf16, emit a lane-dense (block of >=128 on
    # the lane axis) output slab, and budget tiles against v7x's 64 MiB VMEM (vs 128 MiB on
    # v5e/v6e); only then reintroduce a batch/T grid with dimension_semantics=("parallel",...).
    out = pl.pallas_call(
        variance_predictor_kernel,
        out_shape=jax.ShapeDtypeStruct((BT, 1), jnp.float32),
        grid=(1,),                                                      # single invocation
        in_specs=[
            pl.BlockSpec((BT, C_IN), lambda i: (0, 0)),                 # x (full block)
            pl.BlockSpec((K, C_IN, H), lambda i: (0, 0, 0)),            # w1
            pl.BlockSpec((K, H, H), lambda i: (0, 0, 0)),               # w2
            pl.BlockSpec((8, H), lambda i: (0, 0)),                     # packed vectors
            pl.BlockSpec(memory_space=pltpu.MemorySpace.SMEM),          # folded scalars
        ],
        out_specs=pl.BlockSpec((BT, 1), lambda i: (0, 0)),
    )(x2d, w1, w2, vecpack, scalars)
    return out.reshape(B, T)


def variance_predictor_reference(seqs, params):
    """Plain-JAX reference mirroring PyTorch semantics (eval mode, no mask, no FiLM)."""
    def conv1d_same(x_btc, w_oik, b):
        x_bct = jnp.transpose(x_btc, (0, 2, 1))                         # NCW like PyTorch
        y = jax.lax.conv_general_dilated(
            x_bct, w_oik, window_strides=(1,),
            padding=[(PAD_L, (K - 1) - PAD_L)],
            dimension_numbers=("NCH", "OIH", "NCH"),
            precision=jax.lax.Precision.HIGHEST)
        y = y + b[None, :, None]
        return jnp.transpose(y, (0, 2, 1))

    def layer_norm(x, g, b):
        mu = jnp.mean(x, axis=-1, keepdims=True)
        var = jnp.mean((x - mu) ** 2, axis=-1, keepdims=True)
        return (x - mu) / jnp.sqrt(var + EPS) * g + b

    h = jax.nn.relu(conv1d_same(seqs, params["w1_oik"], params["b1"]))
    h = layer_norm(h, params["g1"], params["be1"])
    h = jax.nn.relu(conv1d_same(h, params["w2_oik"], params["b2"]))
    h = layer_norm(h, params["g2"], params["be2"])
    y = jnp.einsum("btc,cd->btd", h, params["wp"],
                   precision=jax.lax.Precision.HIGHEST) + params["bp"]
    return y[:, :, 0]


def make_params(key):
    ks = jax.random.split(key, 8)
    return {
        "w1_oik": 0.1 * jax.random.normal(ks[0], (H, C_IN, K), jnp.float32),
        "b1": 0.1 * jax.random.normal(ks[1], (H,), jnp.float32),
        "g1": 1.0 + 0.05 * jax.random.normal(ks[2], (H,), jnp.float32),
        "be1": 0.05 * jax.random.normal(ks[3], (H,), jnp.float32),
        "w2_oik": 0.1 * jax.random.normal(ks[4], (H, H, K), jnp.float32),
        "b2": 0.1 * jax.random.normal(ks[5], (H,), jnp.float32),
        "g2": 1.0 + 0.05 * jax.random.normal(ks[6], (H,), jnp.float32),
        "be2": 0.05 * jax.random.normal(ks[7], (H,), jnp.float32),
        "wp": 0.1 * jax.random.normal(jax.random.fold_in(key, 100), (H, 1), jnp.float32),
        "bp": jnp.array(0.02, jnp.float32),
    }


if __name__ == "__main__":
    key = jax.random.PRNGKey(0)
    pkey, xkey = jax.random.split(key)
    params = make_params(pkey)
    seqs = jax.random.normal(xkey, (B, T, C_IN), jnp.float32)

    out = variance_predictor_pallas(seqs, params)
    out = jax.block_until_ready(out)

    ref = jax.block_until_ready(variance_predictor_reference(seqs, params))
    assert out.shape == (B, T), out.shape
    assert jnp.allclose(out, ref, atol=1e-3, rtol=1e-3), (out, ref)

    print("KERNEL_OK")
</pallas_src>

<mosaic_0001>
module attributes {stable_mosaic.version = 11 : i64} {
  func.func @variance_predictor_kernel(%arg0: i32, %arg1: memref<16x32xf32, #tpu.memory_space<vmem>>, %arg2: memref<3x32x32xf32, #tpu.memory_space<vmem>>, %arg3: memref<3x32x32xf32, #tpu.memory_space<vmem>>, %arg4: memref<8x32xf32, #tpu.memory_space<vmem>>, %arg5: memref<2xf32, #tpu.memory_space<smem>>, %arg6: memref<16x1xf32, #tpu.memory_space<vmem>>) attributes {dimension_semantics = [#tpu.dimension_semantics<arbitrary>], iteration_bounds = array<i64: 1>, scalar_prefetch = 0 : i64, scratch_operands = 0 : i64, tpu.core_type = #tpu.core_type<tc>, window_params = [{pipeline_mode = #tpu.pipeline_mode<synchronous>, transform_indices = @transform_0, window_bounds = array<i64: 16, 32>}, {pipeline_mode = #tpu.pipeline_mode<synchronous>, transform_indices = @transform_1, window_bounds = array<i64: 3, 32, 32>}, {pipeline_mode = #tpu.pipeline_mode<synchronous>, transform_indices = @transform_2, window_bounds = array<i64: 3, 32, 32>}, {pipeline_mode = #tpu.pipeline_mode<synchronous>, transform_indices = @transform_3, window_bounds = array<i64: 8, 32>}, {transform_indices = @transform_4, window_bounds = array<i64: 2>}, {pipeline_mode = #tpu.pipeline_mode<synchronous>, transform_indices = @transform_5, window_bounds = array<i64: 16, 1>}]} {
    %c0 = arith.constant 0 : index
    %c0_0 = arith.constant 0 : index
    %0 = vector.load %arg1[%c0, %c0_0] : memref<16x32xf32, #tpu.memory_space<vmem>>, vector<16x32xf32>
    %1 = tpu.iota {dimensions = array<i32: 0>} : vector<16x1xi32>
    %c8_i32 = arith.constant 8 : i32
    %c0_i32 = arith.constant 0 : i32
    %2 = arith.cmpi eq, %c8_i32, %c0_i32 : i32
    %c1_i32 = arith.constant 1 : i32
    %3 = arith.select %2, %c1_i32, %c8_i32 : i32
    %4 = vector.broadcast %3 : i32 to vector<16x1xi32>
    %5 = arith.remsi %1, %4 : vector<16x1xi32>
    %c0_i32_1 = arith.constant 0 : i32
    %6 = vector.broadcast %c0_i32_1 : i32 to vector<16x1xi32>
    %7 = arith.cmpi ne, %5, %6 : vector<16x1xi32>
    %c0_i32_2 = arith.constant 0 : i32
    %8 = vector.broadcast %c0_i32_2 : i32 to vector<16x1xi32>
    %9 = arith.cmpi slt, %5, %8 : vector<16x1xi32>
    %c0_i32_3 = arith.constant 0 : i32
    %10 = arith.cmpi slt, %3, %c0_i32_3 : i32
    %11 = vector.broadcast %10 : i1 to vector<16x1xi1>
    %12 = vector.broadcast %11 : vector<16x1xi1> to vector<16x1xi1>
    %13 = arith.xori %9, %12 : vector<16x1xi1>
    %14 = arith.andi %13, %7 : vector<16x1xi1>
    %15 = vector.broadcast %3 : i32 to vector<16x1xi32>
    %16 = arith.addi %5, %15 : vector<16x1xi32>
    %17 = arith.select %14, %16, %5 : vector<16x1xi1>, vector<16x1xi32>
    %c0_4 = arith.constant 0 : index
    %c0_5 = arith.constant 0 : index
    %18 = vector.load %arg4[%c0_4, %c0_5] : memref<8x32xf32, #tpu.memory_space<vmem>>, vector<1x32xf32>
    %c1 = arith.constant 1 : index
    %c0_6 = arith.constant 0 : index
    %19 = vector.load %arg4[%c1, %c0_6] : memref<8x32xf32, #tpu.memory_space<vmem>>, vector<1x32xf32>
    %c2 = arith.constant 2 : index
    %c0_7 = arith.constant 0 : index
    %20 = vector.load %arg4[%c2, %c0_7] : memref<8x32xf32, #tpu.memory_space<vmem>>, vector<1x32xf32>
    %c3 = arith.constant 3 : index
    %c0_8 = arith.constant 0 : index
    %21 = vector.load %arg4[%c3, %c0_8] : memref<8x32xf32, #tpu.memory_space<vmem>>, vector<1x32xf32>
    %c4 = arith.constant 4 : index
    %c0_9 = arith.constant 0 : index
    %22 = vector.load %arg4[%c4, %c0_9] : memref<8x32xf32, #tpu.memory_space<vmem>>, vector<1x32xf32>
    %c0_10 = arith.constant 0 : index
    %23 = memref.load %arg5[%c0_10] : memref<2xf32, #tpu.memory_space<smem>>
    %c1_11 = arith.constant 1 : index
    %24 = memref.load %arg5[%c1_11] : memref<2xf32, #tpu.memory_space<smem>>
    %c1_i32_12 = arith.constant 1 : i32
    %25 = tpu.dynamic_rotate %0 by %c1_i32_12 dim 0 : vector<16x32xf32>, i32 -> vector<16x32xf32>
    %c1_i32_13 = arith.constant 1 : i32
    %26 = vector.broadcast %c1_i32_13 : i32 to vector<16x1xi32>
    %27 = arith.cmpi sge, %17, %26 : vector<16x1xi32>
    %cst = arith.constant 0.000000e+00 : f32
    %28 = vector.shape_cast %27 : vector<16x1xi1> to vector<16x1xi1>
    %29 = vector.broadcast %28 : vector<16x1xi1> to vector<16x32xi1>
    %30 = vector.broadcast %cst : f32 to vector<16x32xf32>
    %31 = arith.select %29, %25, %30 : vector<16x32xi1>, vector<16x32xf32>
    %c0_14 = arith.constant 0 : index
    %c0_15 = arith.constant 0 : index
    %c0_16 = arith.constant 0 : index
    %32 = vector.load %arg2[%c0_14, %c0_15, %c0_16] : memref<3x32x32xf32, #tpu.memory_space<vmem>>, vector<1x32x32xf32>
    %33 = vector.shape_cast %32 : vector<1x32x32xf32> to vector<32x32xf32>
    %cst_17 = arith.constant dense<0.000000e+00> : vector<16x32xf32>
    %34 = tpu.matmul %31, %33, %cst_17 {dimension_numbers = #tpu.dot_dimension_numbers<[1], [0], [0], [1], [0, 0, 1, 1], [], []>} : vector<16x32xf32>, vector<32x32xf32>, vector<16x32xf32> -> vector<16x32xf32>
    %c1_18 = arith.constant 1 : index
    %c0_19 = arith.constant 0 : index
    %c0_20 = arith.constant 0 : index
    %35 = vector.load %arg2[%c1_18, %c0_19, %c0_20] : memref<3x32x32xf32, #tpu.memory_space<vmem>>, vector<1x32x32xf32>
    %36 = vector.shape_cast %35 : vector<1x32x32xf32> to vector<32x32xf32>
    %cst_21 = arith.constant dense<0.000000e+00> : vector<16x32xf32>
    %37 = tpu.matmul %0, %36, %cst_21 {dimension_numbers = #tpu.dot_dimension_numbers<[1], [0], [0], [1], [0, 0, 1, 1], [], []>} : vector<16x32xf32>, vector<32x32xf32>, vector<16x32xf32> -> vector<16x32xf32>
    %38 = arith.addf %34, %37 : vector<16x32xf32>
    %c15_i32 = arith.constant 15 : i32
    %39 = tpu.dynamic_rotate %0 by %c15_i32 dim 0 : vector<16x32xf32>, i32 -> vector<16x32xf32>
    %c7_i32 = arith.constant 7 : i32
    %40 = vector.broadcast %c7_i32 : i32 to vector<16x1xi32>
    %41 = arith.cmpi slt, %17, %40 : vector<16x1xi32>
    %cst_22 = arith.constant 0.000000e+00 : f32
    %42 = vector.shape_cast %41 : vector<16x1xi1> to vector<16x1xi1>
    %43 = vector.broadcast %42 : vector<16x1xi1> to vector<16x32xi1>
    %44 = vector.broadcast %cst_22 : f32 to vector<16x32xf32>
    %45 = arith.select %43, %39, %44 : vector<16x32xi1>, vector<16x32xf32>
    %c2_23 = arith.constant 2 : index
    %c0_24 = arith.constant 0 : index
    %c0_25 = arith.constant 0 : index
    %46 = vector.load %arg2[%c2_23, %c0_24, %c0_25] : memref<3x32x32xf32, #tpu.memory_space<vmem>>, vector<1x32x32xf32>
    %47 = vector.shape_cast %46 : vector<1x32x32xf32> to vector<32x32xf32>
    %cst_26 = arith.constant dense<0.000000e+00> : vector<16x32xf32>
    %48 = tpu.matmul %45, %47, %cst_26 {dimension_numbers = #tpu.dot_dimension_numbers<[1], [0], [0], [1], [0, 0, 1, 1], [], []>} : vector<16x32xf32>, vector<32x32xf32>, vector<16x32xf32> -> vector<16x32xf32>
    %49 = arith.addf %38, %48 : vector<16x32xf32>
    %50 = vector.broadcast %18 : vector<1x32xf32> to vector<16x32xf32>
    %51 = arith.addf %49, %50 : vector<16x32xf32>
    %cst_27 = arith.constant 0.000000e+00 : f32
    %52 = vector.broadcast %cst_27 : f32 to vector<16x32xf32>
    %53 = arith.maximumf %51, %52 : vector<16x32xf32>
    %cst_28 = arith.constant dense<0.000000e+00> : vector<16xf32>
    %54 = vector.multi_reduction <add>, %53, %cst_28 [1] : vector<16x32xf32> to vector<16xf32>
    %55 = vector.shape_cast %54 : vector<16xf32> to vector<16x1xf32>
    %cst_29 = arith.constant 3.200000e+01 : f32
    %56 = vector.broadcast %cst_29 : f32 to vector<16x1xf32>
    %57 = arith.divf %55, %56 : vector<16x1xf32>
    %58 = arith.mulf %53, %53 : vector<16x32xf32>
    %cst_30 = arith.constant dense<0.000000e+00> : vector<16xf32>
    %59 = vector.multi_reduction <add>, %58, %cst_30 [1] : vector<16x32xf32> to vector<16xf32>
    %60 = vector.shape_cast %59 : vector<16xf32> to vector<16x1xf32>
    %cst_31 = arith.constant 3.200000e+01 : f32
    %61 = vector.broadcast %cst_31 : f32 to vector<16x1xf32>
    %62 = arith.divf %60, %61 : vector<16x1xf32>
    %63 = arith.mulf %57, %57 : vector<16x1xf32>
    %64 = arith.subf %62, %63 : vector<16x1xf32>
    %65 = vector.broadcast %57 : vector<16x1xf32> to vector<16x32xf32>
    %66 = arith.subf %53, %65 : vector<16x32xf32>
    %cst_32 = arith.constant 9.99999974E-6 : f32
    %67 = vector.broadcast %cst_32 : f32 to vector<16x1xf32>
    %68 = arith.addf %64, %67 : vector<16x1xf32>
    %69 = math.rsqrt %68 : vector<16x1xf32>
    %70 = vector.broadcast %69 : vector<16x1xf32> to vector<16x32xf32>
    %71 = arith.mulf %66, %70 : vector<16x32xf32>
    %72 = vector.broadcast %19 : vector<1x32xf32> to vector<16x32xf32>
    %73 = arith.mulf %71, %72 : vector<16x32xf32>
    %74 = vector.broadcast %20 : vector<1x32xf32> to vector<16x32xf32>
    %75 = arith.addf %73, %74 : vector<16x32xf32>
    %c1_i32_33 = arith.constant 1 : i32
    %76 = tpu.dynamic_rotate %75 by %c1_i32_33 dim 0 : vector<16x32xf32>, i32 -> vector<16x32xf32>
    %c1_i32_34 = arith.constant 1 : i32
    %77 = vector.broadcast %c1_i32_34 : i32 to vector<16x1xi32>
    %78 = arith.cmpi sge, %17, %77 : vector<16x1xi32>
    %cst_35 = arith.constant 0.000000e+00 : f32
    %79 = vector.shape_cast %78 : vector<16x1xi1> to vector<16x1xi1>
    %80 = vector.broadcast %79 : vector<16x1xi1> to vector<16x32xi1>
    %81 = vector.broadcast %cst_35 : f32 to vector<16x32xf32>
    %82 = arith.select %80, %76, %81 : vector<16x32xi1>, vector<16x32xf32>
    %c0_36 = arith.constant 0 : index
    %c0_37 = arith.constant 0 : index
    %c0_38 = arith.constant 0 : index
    %83 = vector.load %arg3[%c0_36, %c0_37, %c0_38] : memref<3x32x32xf32, #tpu.memory_space<vmem>>, vector<1x32x32xf32>
    %84 = vector.shape_cast %83 : vector<1x32x32xf32> to vector<32x32xf32>
    %cst_39 = arith.constant dense<0.000000e+00> : vector<16x32xf32>
    %85 = tpu.matmul %82, %84, %cst_39 {dimension_numbers = #tpu.dot_dimension_numbers<[1], [0], [0], [1], [0, 0, 1, 1], [], []>} : vector<16x32xf32>, vector<32x32xf32>, vector<16x32xf32> -> vector<16x32xf32>
    %c1_40 = arith.constant 1 : index
    %c0_41 = arith.constant 0 : index
    %c0_42 = arith.constant 0 : index
    %86 = vector.load %arg3[%c1_40, %c0_41, %c0_42] : memref<3x32x32xf32, #tpu.memory_space<vmem>>, vector<1x32x32xf32>
    %87 = vector.shape_cast %86 : vector<1x32x32xf32> to vector<32x32xf32>
    %cst_43 = arith.constant dense<0.000000e+00> : vector<16x32xf32>
    %88 = tpu.matmul %75, %87, %cst_43 {dimension_numbers = #tpu.dot_dimension_numbers<[1], [0], [0], [1], [0, 0, 1, 1], [], []>} : vector<16x32xf32>, vector<32x32xf32>, vector<16x32xf32> -> vector<16x32xf32>
    %89 = arith.addf %85, %88 : vector<16x32xf32>
    %c15_i32_44 = arith.constant 15 : i32
    %90 = tpu.dynamic_rotate %75 by %c15_i32_44 dim 0 : vector<16x32xf32>, i32 -> vector<16x32xf32>
    %c7_i32_45 = arith.constant 7 : i32
    %91 = vector.broadcast %c7_i32_45 : i32 to vector<16x1xi32>
    %92 = arith.cmpi slt, %17, %91 : vector<16x1xi32>
    %cst_46 = arith.constant 0.000000e+00 : f32
    %93 = vector.shape_cast %92 : vector<16x1xi1> to vector<16x1xi1>
    %94 = vector.broadcast %93 : vector<16x1xi1> to vector<16x32xi1>
    %95 = vector.broadcast %cst_46 : f32 to vector<16x32xf32>
    %96 = arith.select %94, %90, %95 : vector<16x32xi1>, vector<16x32xf32>
    %c2_47 = arith.constant 2 : index
    %c0_48 = arith.constant 0 : index
    %c0_49 = arith.constant 0 : index
    %97 = vector.load %arg3[%c2_47, %c0_48, %c0_49] : memref<3x32x32xf32, #tpu.memory_space<vmem>>, vector<1x32x32xf32>
    %98 = vector.shape_cast %97 : vector<1x32x32xf32> to vector<32x32xf32>
    %cst_50 = arith.constant dense<0.000000e+00> : vector<16x32xf32>
    %99 = tpu.matmul %96, %98, %cst_50 {dimension_numbers = #tpu.dot_dimension_numbers<[1], [0], [0], [1], [0, 0, 1, 1], [], []>} : vector<16x32xf32>, vector<32x32xf32>, vector<16x32xf32> -> vector<16x32xf32>
    %100 = arith.addf %89, %99 : vector<16x32xf32>
    %101 = vector.broadcast %21 : vector<1x32xf32> to vector<16x32xf32>
    %102 = arith.addf %100, %101 : vector<16x32xf32>
    %cst_51 = arith.constant 0.000000e+00 : f32
    %103 = vector.broadcast %cst_51 : f32 to vector<16x32xf32>
    %104 = arith.maximumf %102, %103 : vector<16x32xf32>
    %cst_52 = arith.constant dense<0.000000e+00> : vector<16xf32>
    %105 = vector.multi_reduction <add>, %104, %cst_52 [1] : vector<16x32xf32> to vector<16xf32>
    %106 = vector.shape_cast %105 : vector<16xf32> to vector<16x1xf32>
    %cst_53 = arith.constant 3.200000e+01 : f32
    %107 = vector.broadcast %cst_53 : f32 to vector<16x1xf32>
    %108 = arith.divf %106, %107 : vector<16x1xf32>
    %109 = arith.mulf %104, %104 : vector<16x32xf32>
    %cst_54 = arith.constant dense<0.000000e+00> : vector<16xf32>
    %110 = vector.multi_reduction <add>, %109, %cst_54 [1] : vector<16x32xf32> to vector<16xf32>
    %111 = vector.shape_cast %110 : vector<16xf32> to vector<16x1xf32>
    %cst_55 = arith.constant 3.200000e+01 : f32
    %112 = vector.broadcast %cst_55 : f32 to vector<16x1xf32>
    %113 = arith.divf %111, %112 : vector<16x1xf32>
    %114 = arith.mulf %108, %108 : vector<16x1xf32>
    %115 = arith.subf %113, %114 : vector<16x1xf32>
    %116 = vector.broadcast %22 : vector<1x32xf32> to vector<16x32xf32>
    %117 = arith.mulf %104, %116 : vector<16x32xf32>
    %cst_56 = arith.constant dense<0.000000e+00> : vector<16xf32>
    %118 = vector.multi_reduction <add>, %117, %cst_56 [1] : vector<16x32xf32> to vector<16xf32>
    %119 = vector.shape_cast %118 : vector<16xf32> to vector<16x1xf32>
    %120 = vector.broadcast %24 : f32 to vector<16x1xf32>
    %121 = arith.mulf %108, %120 : vector<16x1xf32>
    %122 = arith.subf %119, %121 : vector<16x1xf32>
    %cst_57 = arith.constant 9.99999974E-6 : f32
    %123 = vector.broadcast %cst_57 : f32 to vector<16x1xf32>
    %124 = arith.addf %115, %123 : vector<16x1xf32>
    %125 = math.rsqrt %124 : vector<16x1xf32>
    %126 = arith.mulf %122, %125 : vector<16x1xf32>
    %127 = vector.broadcast %23 : f32 to vector<16x1xf32>
    %128 = arith.addf %126, %127 : vector<16x1xf32>
    %c0_58 = arith.constant 0 : index
    %c0_59 = arith.constant 0 : index
    %129 = vector.load %arg6[%c0_58, %c0_59] : memref<16x1xf32, #tpu.memory_space<vmem>>, vector<16x1xf32>
    tpu.vector_store %arg6[%c0_58, %c0_59], %128 {strides = array<i32>} : memref<16x1xf32, #tpu.memory_space<vmem>>, vector<16x1xf32>,
    return
  }
  func.func @transform_0(%arg0: i32) -> (i32, i32) {
    %c0_i32 = arith.constant 0 : i32
    %c0_i32_0 = arith.constant 0 : i32
    %c0_i32_1 = arith.constant 0 : i32
    return %c0_i32, %c0_i32_0 : i32, i32
  }
  func.func @transform_1(%arg0: i32) -> (i32, i32, i32) {
    %c0_i32 = arith.constant 0 : i32
    %c0_i32_0 = arith.constant 0 : i32
    %c0_i32_1 = arith.constant 0 : i32
    %c0_i32_2 = arith.constant 0 : i32
    return %c0_i32, %c0_i32_0, %c0_i32_1 : i32, i32, i32
  }
  func.func @transform_2(%arg0: i32) -> (i32, i32, i32) {
    %c0_i32 = arith.constant 0 : i32
    %c0_i32_0 = arith.constant 0 : i32
    %c0_i32_1 = arith.constant 0 : i32
    %c0_i32_2 = arith.constant 0 : i32
    return %c0_i32, %c0_i32_0, %c0_i32_1 : i32, i32, i32
  }
  func.func @transform_3(%arg0: i32) -> (i32, i32) {
    %c0_i32 = arith.constant 0 : i32
    %c0_i32_0 = arith.constant 0 : i32
    %c0_i32_1 = arith.constant 0 : i32
    return %c0_i32, %c0_i32_0 : i32, i32
  }
  func.func @transform_4(%arg0: i32) -> i32 {
    %c0_i32 = arith.constant 0 : i32
    %c0_i32_0 = arith.constant 0 : i32
    return %c0_i32 : i32
  }
  func.func @transform_5(%arg0: i32) -> (i32, i32) {
    %c0_i32 = arith.constant 0 : i32
    %c0_i32_0 = arith.constant 0 : i32
    %c0_i32_1 = arith.constant 0 : i32
    return %c0_i32, %c0_i32_0 : i32, i32
  }
}

</mosaic_0001>

<llo_original>
// kernel: tpu_custom_call.1
$region0: #{tpu_custom_call.1}
  #allocation0 [shape = 'u32[]', space=smem, size = 0x4, offset = 0x4, fixed_abs, tag = 'smem constant byte address 0x4 - core index']
  #allocation1 [shape = 'u32[72,128]{1,0:T(1,128)}', space=vmem, size = 0x9000, scoped, tag = 'internal scratch']
  %s0 = inlined_call_operand.hbm [shape: f32[16,32], index: 0, kind: input, shape index: {}]
  %s1 = inlined_call_operand.hbm [shape: f32[3,32,32], index: 1, kind: input, shape index: {}]
  %s2 = inlined_call_operand.hbm [shape: f32[3,32,32], index: 2, kind: input, shape index: {}]
  %s3 = inlined_call_operand.hbm [shape: f32[8,32], index: 3, kind: input, shape index: {}]
  %s4 = inlined_call_operand.vmem [shape: f32[2], index: 4, kind: input, shape index: {}]
  %s5 = inlined_call_operand.vmem [shape: f32[16,1], index: 5, kind: output, shape index: {}]
  %s6 = sld [smem:[#allocation0]]
  $region50: #{tpu_custom_call.1} parent=0
    _
  %s8 = ssub.s32 1, %s6
  %s9 = scalar_select 0, %s8, %s6
  $region1: #{tpu_custom_call.1} parent=0
    #allocation2 [shape = 'u8[8192]{0}', space=vmem, size = 0x2000, scoped, tag = 'input window, operand 0, single buffered']
    #allocation3 [shape = 's32[1]{0}', space=sflag, size = 0x4, scoped, tag = 'scoped memory for tpu_custom_call.1']
    #allocation4 [shape = 's32[1]{0}', space=sflag, size = 0x4, scoped, tag = 'scoped memory for tpu_custom_call.1']
    #allocation5 [shape = 'u8[49152]{0}', space=vmem, size = 0xc000, scoped, tag = 'input window, operand 1, single buffered']
    #allocation6 [shape = 's32[1]{0}', space=sflag, size = 0x4, scoped, tag = 'scoped memory for tpu_custom_call.1']
    #allocation7 [shape = 'u8[49152]{0}', space=vmem, size = 0xc000, scoped, tag = 'input window, operand 2, single buffered']
    #allocation8 [shape = 'u8[4096]{0}', space=vmem, size = 0x1000, scoped, tag = 'input window, operand 3, single buffered']
    #allocation9 [shape = 's32[1]{0}', space=sflag, size = 0x4, scoped, tag = 'scoped memory for tpu_custom_call.1']
    #allocation10 [shape = 'u8[512]{0}', space=smem, size = 0x200, scoped, tag = 'input window, operand 4, single buffered']
    %10 = vsyncpa [#allocation3], 0
    %11 = vsyncpa [#allocation6], 0
    %12 = vsyncpa [#allocation9], 0
    %13 = vsyncpa [#allocation4], 0
    // Predicated region
    $region2: #{tpu_custom_call.1} parent=1 // pred_check
      _
    $region3: #{tpu_custom_call.1} parent=1 // pred_check_branch
      %15 = sbr.rel (0) target = $region5
    $region4: #{tpu_custom_call.1} parent=1 // pred_region
      %17 = vsyncadd [#allocation3], 0
      %s18 = sshll.u32 %s0, 4
      %s19 = int_to_ptr.hbm [resolvable:$true] %s18
      %s20 = sshll.u32 [#allocation2], 4
      %s21 = int_to_ptr.vmem [resolvable:$true] %s20
      %26 = dma.hbm_to_vmem [thread:$0]  %s19, 256, %s21, [#allocation3], 128, 128, 8
    $region5: #{tpu_custom_call.1} parent=1 // pred_fallthru
      _
    // Predicated region
    $region6: #{tpu_custom_call.1} parent=1 // pred_check
      _
    $region7: #{tpu_custom_call.1} parent=1 // pred_check_branch
      %28 = sbr.rel (0) target = $region9
    $region8: #{tpu_custom_call.1} parent=1 // pred_region
      %30 = vsyncadd [#allocation6], 0
      %s31 = sshll.u32 %s1, 4
      %s32 = int_to_ptr.hbm [resolvable:$true] %s31
      %s33 = sshll.u32 [#allocation5], 4
      %s34 = int_to_ptr.vmem [resolvable:$true] %s33
      %39 = dma.hbm_to_vmem [thread:$0]  %s32, 1536, %s34, [#allocation6], 128, 128, 8
    $region9: #{tpu_custom_call.1} parent=1 // pred_fallthru
      _
    // Predicated region
    $region10: #{tpu_custom_call.1} parent=1 // pred_check
      _
    $region11: #{tpu_custom_call.1} parent=1 // pred_check_branch
      %41 = sbr.rel (0) target = $region13
    $region12: #{tpu_custom_call.1} parent=1 // pred_region
      %43 = vsyncadd [#allocation6], 0
      %s44 = sshll.u32 %s2, 4
      %s45 = int_to_ptr.hbm [resolvable:$true] %s44
      %s46 = sshll.u32 [#allocation7], 4
      %s47 = int_to_ptr.vmem [resolvable:$true] %s46
      %52 = dma.hbm_to_vmem [thread:$0]  %s45, 1536, %s47, [#allocation6], 128, 128, 8
    $region13: #{tpu_custom_call.1} parent=1 // pred_fallthru
      _
    // Predicated region
    $region14: #{tpu_custom_call.1} parent=1 // pred_check
      _
    $region15: #{tpu_custom_call.1} parent=1 // pred_check_branch
      %54 = sbr.rel (0) target = $region17
    $region16: #{tpu_custom_call.1} parent=1 // pred_region
      %56 = vsyncadd [#allocation9], 0
      %s58 = sshll.u32 %s3, 4
      %s59 = int_to_ptr.hbm [resolvable:$true] %s58
      %s60 = sshll.u32 [#allocation8], 4
      %s61 = int_to_ptr.vmem [resolvable:$true] %s60
      %63 = dma.hbm_to_vmem [thread:$0]  %s59, 128, %s61, [#allocation9]
    $region17: #{tpu_custom_call.1} parent=1 // pred_fallthru
      _
    // Predicated region
    $region18: #{tpu_custom_call.1} parent=1 // pred_check
      _
    $region19: #{tpu_custom_call.1} parent=1 // pred_check_branch
      %65 = sbr.rel (0) target = $region21
    $region20: #{tpu_custom_call.1} parent=1 // pred_region
      %67 = vsyncadd [#allocation4], 0
      %s69 = sshll.u32 %s4, 4
      %s70 = int_to_ptr.vmem [resolvable:$true] %s69
      %72 = dma.vmem_to_smem %s70, 16, [#allocation10], [#allocation4]
    $region21: #{tpu_custom_call.1} parent=1 // pred_fallthru
      _
    // Predicated region
    $region22: #{tpu_custom_call.1} parent=1 // pred_check
      _
    $region23: #{tpu_custom_call.1} parent=1 // pred_check_branch
      %74 = sbr.rel (0) target = $region25
    $region24: #{tpu_custom_call.1} parent=1 // pred_region
      %76 = dma.done [#allocation3], 256
    $region25: #{tpu_custom_call.1} parent=1 // pred_fallthru
      _
    // Predicated region
    $region26: #{tpu_custom_call.1} parent=1 // pred_check
      _
    $region27: #{tpu_custom_call.1} parent=1 // pred_check_branch
      %78 = sbr.rel (0) target = $region29
    $region28: #{tpu_custom_call.1} parent=1 // pred_region
      %80 = dma.done [#allocation6], 1536
    $region29: #{tpu_custom_call.1} parent=1 // pred_fallthru
      _
    // Predicated region
    $region30: #{tpu_custom_call.1} parent=1 // pred_check
      _
    $region31: #{tpu_custom_call.1} parent=1 // pred_check_branch
      %82 = sbr.rel (0) target = $region33
    $region32: #{tpu_custom_call.1} parent=1 // pred_region
      %84 = dma.done [#allocation6], 1536
    $region33: #{tpu_custom_call.1} parent=1 // pred_fallthru
      _
    // Predicated region
    $region34: #{tpu_custom_call.1} parent=1 // pred_check
      _
    $region35: #{tpu_custom_call.1} parent=1 // pred_check_branch
      %86 = sbr.rel (0) target = $region37
    $region36: #{tpu_custom_call.1} parent=1 // pred_region
      %88 = dma.done [#allocation9], 128
    $region37: #{tpu_custom_call.1} parent=1 // pred_fallthru
      _
    // Predicated region
    $region38: #{tpu_custom_call.1} parent=1 // pred_check
      _
    $region39: #{tpu_custom_call.1} parent=1 // pred_check_branch
      %90 = sbr.rel (0) target = $region41
    $region40: #{tpu_custom_call.1} parent=1 // pred_region
      %92 = dma.done [#allocation4], 16
    $region41: #{tpu_custom_call.1} parent=1 // pred_fallthru
      _
    %93 = sfence
    %v94 = vld [vmem:[#allocation2] sm:$0xff]
    %v95 = vld [vmem:[#allocation2 + $0x8] sm:$0xff]
    %v96 = vlaneseq
    %v97 = vshrl.u32 %v96, 7
    %v98 = vadd.s32 %v97, 8
    %vm99 = vcmp.lt.s32.totalorder %v97, 0
    %v100 = vsub.s32 0, %v97
    %v101 = vsel %vm99, %v100, %v97
    %v102 = vshrl.u32 %v101, 3
    %v103 = vand.u32 %v101, 7
    %v104 = vsub.s32 0, %v103
    %v105 = vsel %vm99, %v104, %v103
    %vm106 = vcmp.lt.s32.totalorder %v98, 0
    %v107 = vsub.s32 0, %v98
    %v108 = vsel %vm106, %v107, %v98
    %v109 = vshrl.u32 %v108, 3
    %v110 = vand.u32 %v108, 7
    %v111 = vsub.s32 0, %v110
    %v112 = vsel %vm106, %v111, %v110
    %vm113 = vcmp.ne.s32.totalorder %v105, 0
    %vm114 = vcmp.ne.s32.totalorder %v112, 0
    %vm115 = vcmp.lt.s32.totalorder %v105, 0
    %vm116 = vcmp.lt.s32.totalorder %v112, 0
    %vm117 = vmand %vm115, %vm113
    %vm118 = vmand %vm116, %vm114
    %v119 = vadd.s32 %v105, 8
    %v120 = vadd.s32 %v112, 8
    %v121 = vsel %vm117, %v119, %v105
    %v122 = vsel %vm118, %v120, %v112
    %v123 = vld [vmem:[#allocation8] sm:$0x1]
    %v124 = vld [vmem:[#allocation8 + $0x1] sm:$0x1]
    %v125 = vld [vmem:[#allocation8 + $0x2] sm:$0x1]
    %v126 = vld [vmem:[#allocation8 + $0x3] sm:$0x1]
    %v127 = vld [vmem:[#allocation8 + $0x4] sm:$0x1]
    %s128 = sld [smem:[#allocation10]]
    %s129 = sld [smem:[#allocation10 + $0x1]]
    %v130 = vrot.slane %v94, 7
    %v131 = vrot.slane %v95, 7
    %vm132 = vcmp.lt.s32.totalorder %v97, 1
    %v133 = vsel %vm132, %v130, %v131
    %v134 = vsel %vm132, %v131, %v130
    %vm135 = vcmp.ge.s32.totalorder %v121, 1
    %vm136 = vcmp.ge.s32.totalorder %v122, 1
    %v137 = vsel %vm135, 1, 0
    %v138 = vsel %vm136, 1, 0
    %vm139 = vcmp.eq.s32.totalorder %v137, 1
    %vm140 = vcmp.eq.s32.totalorder %v138, 1
    %v141 = vsel %vm139, %v134, 0.0
    %v142 = vsel %vm140, %v133, 0.0
    %v143 = vld [vmem:[#allocation5] sm:$0xff]
    %v144 = vld [vmem:[#allocation5 + $0x8] sm:$0xff]
    %v145 = vld [vmem:[#allocation5 + $0x10] sm:$0xff]
    %v146 = vld [vmem:[#allocation5 + $0x18] sm:$0xff]
    %s147 = scalar_lea.vmem [#allocation5], 32
    %v148 = vld [vmem:[%s147] sm:$0xff]
    %v149 = vld [vmem:[%s147 + $0x8] sm:$0xff]
    %v150 = vld [vmem:[%s147 + $0x10] sm:$0xff]
    %v151 = vld [vmem:[%s147 + $0x18] sm:$0xff]
    %vm152 = vcmask 261120
    %v154 = vsel %vm152, %v94, 0
    %v157 = vsel %vm152, %v95, 0
    %159 = vmatpush.msra.mxu0 0.0
    %160 = vmatpush.msra.mxu0 0.0
    %161 = vmatpush.msra.mxu0 0.0
    %162 = vmatpush.msra.mxu0 0.0
    %163 = vmatpush.msra.mxu0 0.0
    %164 = vmatpush.msra.mxu0 0.0
    %165 = vmatpush.msra.mxu0 0.0
    %166 = vmatpush.msra.mxu0 0.0
    %167 = vmatpush.msra.mxu0 0.0
    %168 = vmatpush.msra.mxu0 0.0
    %169 = vmatpush.msra.mxu0 0.0
    %170 = vmatpush.msra.mxu0 0.0
    %171 = vmatpush.msra.mxu0 %v151
    %172 = vmatpush.msra.mxu0 %v150
    %173 = vmatpush.msra.mxu0 %v149
    %174 = vmatpush.msra.mxu0 %v148
    %175 = vmatmul.f32.gmra.mxu0 %v154
    %v176 = vpop.f32.mrf.mxu0
    %v177 = vadd.f32 0.0, %v176
    %178 = vmatmul.f32.gmra.mxu0 %v157
    %v179 = vpop.f32.mrf.mxu0
    %v180 = vadd.f32 0.0, %v179
    %181 = vdwg.mxu0
    %v183 = vsel %vm152, %v141, 0
    %v186 = vsel %vm152, %v142, 0
    %188 = vmatpush.msra.mxu0 0.0
    %189 = vmatpush.msra.mxu0 0.0
    %190 = vmatpush.msra.mxu0 0.0
    %191 = vmatpush.msra.mxu0 0.0
    %192 = vmatpush.msra.mxu0 0.0
    %193 = vmatpush.msra.mxu0 0.0
    %194 = vmatpush.msra.mxu0 0.0
    %195 = vmatpush.msra.mxu0 0.0
    %196 = vmatpush.msra.mxu0 0.0
    %197 = vmatpush.msra.mxu0 0.0
    %198 = vmatpush.msra.mxu0 0.0
    %199 = vmatpush.msra.mxu0 0.0
    %200 = vmatpush.msra.mxu0 %v146
    %201 = vmatpush.msra.mxu0 %v145
    %202 = vmatpush.msra.mxu0 %v144
    %203 = vmatpush.msra.mxu0 %v143
    %204 = vmatmul.f32.gmra.mxu0 %v183
    %v205 = vpop.f32.mrf.mxu0
    %v206 = vadd.f32 %v177, %v205
    %207 = vmatmul.f32.gmra.mxu0 %v186
    %v208 = vpop.f32.mrf.mxu0
    %v209 = vadd.f32 %v180, %v208
    %210 = vdwg.mxu0
    %v211 = vrot.slane %v94, 1
    %v212 = vrot.slane %v95, 1
    %vm213 = vcmp.lt.s32.totalorder %v97, 7
    %v214 = vsel %vm213, %v211, %v212
    %v215 = vsel %vm213, %v212, %v211
    %vm216 = vcmp.lt.s32.totalorder %v121, 7
    %vm217 = vcmp.lt.s32.totalorder %v122, 7
    %v218 = vsel %vm216, 1, 0
    %v219 = vsel %vm217, 1, 0
    %vm220 = vcmp.eq.s32.totalorder %v218, 1
    %vm221 = vcmp.eq.s32.totalorder %v219, 1
    %v222 = vsel %vm220, %v214, 0.0
    %v223 = vsel %vm221, %v215, 0.0
    %s224 = scalar_lea.vmem [#allocation5], 64
    %v225 = vld [vmem:[%s224] sm:$0xff]
    %v226 = vld [vmem:[%s224 + $0x8] sm:$0xff]
    %v227 = vld [vmem:[%s224 + $0x10] sm:$0xff]
    %v228 = vld [vmem:[%s224 + $0x18] sm:$0xff]
    %v230 = vsel %vm152, %v222, 0
    %v233 = vsel %vm152, %v223, 0
    %235 = vmatpush.msra.mxu0 0.0
    %236 = vmatpush.msra.mxu0 0.0
    %237 = vmatpush.msra.mxu0 0.0
    %238 = vmatpush.msra.mxu0 0.0
    %239 = vmatpush.msra.mxu0 0.0
    %240 = vmatpush.msra.mxu0 0.0
    %241 = vmatpush.msra.mxu0 0.0
    %242 = vmatpush.msra.mxu0 0.0
    %243 = vmatpush.msra.mxu0 0.0
    %244 = vmatpush.msra.mxu0 0.0
    %245 = vmatpush.msra.mxu0 0.0
    %246 = vmatpush.msra.mxu0 0.0
    %247 = vmatpush.msra.mxu0 %v228
    %248 = vmatpush.msra.mxu0 %v227
    %249 = vmatpush.msra.mxu0 %v226
    %250 = vmatpush.msra.mxu0 %v225
    %251 = vmatmul.f32.gmra.mxu0 %v230
    %v252 = vpop.f32.mrf.mxu0
    %v253 = vadd.f32 0.0, %v252
    %254 = vmatmul.f32.gmra.mxu0 %v233
    %v255 = vpop.f32.mrf.mxu0
    %v256 = vadd.f32 0.0, %v255
    %257 = vdwg.mxu0
    %v258 = vadd.f32 %v206, %v253
    %v259 = vadd.f32 %v209, %v256
    %v260 = vperm.slane %v123, 0
    %v261 = vadd.f32 %v258, %v260
    %v262 = vadd.f32 %v259, %v260
    %v263 = vmax.f32 %v261, 0.0
    %v264 = vmax.f32 %v262, 0.0
    %v265 = vsel %vm152, %v263, 0.0
    %266 = vadd.xlane.f32.xlu0 %v265
    %v267 = vpop.xlane.xlu0 %266
    %v268 = vsel %vm152, %v264, 0.0
    %269 = vadd.xlane.f32.xlu0 %v268
    %v270 = vpop.xlane.xlu0 %269
    %v271 = vrcp.pop 32.0
    %v272 = vmul.f32 32.0, %v271
    %v273 = vsub.f32 1.0, %v272
    %v274 = vmul.f32 %v271, %v273
    %v275 = vadd.f32 %v271, %v274
    %vm276 = vweird.f32 %v271
    %v277 = vsel %vm276, %v271, %v275
    %v278 = vmul.f32 %v267, %v277
    %v279 = vmul.f32 %v270, %v277
    %v280 = vmul.f32 %v263, %v263
    %v281 = vmul.f32 %v264, %v264
    %v282 = vsel %vm152, %v280, 0.0
    %283 = vadd.xlane.f32.xlu0 %v282
    %v284 = vpop.xlane.xlu0 %283
    %v285 = vsel %vm152, %v281, 0.0
    %286 = vadd.xlane.f32.xlu0 %v285
    %v287 = vpop.xlane.xlu0 %286
    %v288 = vmul.f32 %v284, %v277
    %v289 = vmul.f32 %v287, %v277
    %v290 = vmul.f32 %v278, %v278
    %v291 = vmul.f32 %v279, %v279
    %v292 = vsub.f32 %v288, %v290
    %v293 = vsub.f32 %v289, %v291
    %v294 = vsub.f32 %v263, %v278
    %v295 = vsub.f32 %v264, %v279
    %v296 = vadd.f32 %v292, 1e-05
    %v297 = vadd.f32 %v293, 1e-05
    %v298 = vrsqrt.pop %v296
    %v299 = vmul.f32 %v298, %v296
    %v300 = vmul.f32 %v299, %v298
    %v301 = vmul.f32 0.5, %v300
    %v302 = vsub.f32 1.5, %v301
    %v303 = vmul.f32 %v298, %v302
    %vm304 = vweird.f32 %v296
    %vm305 = vweird.f32 %v298
    %vm306 = vmor %vm304, %vm305
    %v307 = vsel %vm306, %v298, %v303
    %v308 = vrsqrt.pop %v297
    %v309 = vmul.f32 %v308, %v297
    %v310 = vmul.f32 %v309, %v308
    %v311 = vmul.f32 0.5, %v310
    %v312 = vsub.f32 1.5, %v311
    %v313 = vmul.f32 %v308, %v312
    %vm314 = vweird.f32 %v297
    %vm315 = vweird.f32 %v308
    %vm316 = vmor %vm314, %vm315
    %v317 = vsel %vm316, %v308, %v313
    %v318 = vmul.f32 %v294, %v307
    %v319 = vmul.f32 %v295, %v317
    %v320 = vperm.slane %v124, 0
    %v321 = vmul.f32 %v318, %v320
    %v322 = vmul.f32 %v319, %v320
    %v323 = vperm.slane %v125, 0
    %v324 = vadd.f32 %v321, %v323
    %v325 = vadd.f32 %v322, %v323
    %v326 = vrot.slane %v324, 7
    %v327 = vrot.slane %v325, 7
    %v328 = vsel %vm132, %v326, %v327
    %v329 = vsel %vm132, %v327, %v326
    %v330 = vsel %vm139, %v329, 0.0
    %v331 = vsel %vm140, %v328, 0.0
    %v332 = vld [vmem:[#allocation7] sm:$0xff]
    %v333 = vld [vmem:[#allocation7 + $0x8] sm:$0xff]
    %v334 = vld [vmem:[#allocation7 + $0x10] sm:$0xff]
    %v335 = vld [vmem:[#allocation7 + $0x18] sm:$0xff]
    %s336 = scalar_lea.vmem [#allocation7], 32
    %v337 = vld [vmem:[%s336] sm:$0xff]
    %v338 = vld [vmem:[%s336 + $0x8] sm:$0xff]
    %v339 = vld [vmem:[%s336 + $0x10] sm:$0xff]
    %v340 = vld [vmem:[%s336 + $0x18] sm:$0xff]
    %v342 = vsel %vm152, %v324, 0
    %v345 = vsel %vm152, %v325, 0
    %347 = vmatpush.msra.mxu0 0.0
    %348 = vmatpush.msra.mxu0 0.0
    %349 = vmatpush.msra.mxu0 0.0
    %350 = vmatpush.msra.mxu0 0.0
    %351 = vmatpush.msra.mxu0 0.0
    %352 = vmatpush.msra.mxu0 0.0
    %353 = vmatpush.msra.mxu0 0.0
    %354 = vmatpush.msra.mxu0 0.0
    %355 = vmatpush.msra.mxu0 0.0
    %356 = vmatpush.msra.mxu0 0.0
    %357 = vmatpush.msra.mxu0 0.0
    %358 = vmatpush.msra.mxu0 0.0
    %359 = vmatpush.msra.mxu0 %v340
    %360 = vmatpush.msra.mxu0 %v339
    %361 = vmatpush.msra.mxu0 %v338
    %362 = vmatpush.msra.mxu0 %v337
    %363 = vmatmul.f32.gmra.mxu0 %v342
    %v364 = vpop.f32.mrf.mxu0
    %v365 = vadd.f32 0.0, %v364
    %366 = vmatmul.f32.gmra.mxu0 %v345
    %v367 = vpop.f32.mrf.mxu0
    %v368 = vadd.f32 0.0, %v367
    %369 = vdwg.mxu0
    %v371 = vsel %vm152, %v330, 0
    %v374 = vsel %vm152, %v331, 0
    %376 = vmatpush.msra.mxu0 0.0
    %377 = vmatpush.msra.mxu0 0.0
    %378 = vmatpush.msra.mxu0 0.0
    %379 = vmatpush.msra.mxu0 0.0
    %380 = vmatpush.msra.mxu0 0.0
    %381 = vmatpush.msra.mxu0 0.0
    %382 = vmatpush.msra.mxu0 0.0
    %383 = vmatpush.msra.mxu0 0.0
    %384 = vmatpush.msra.mxu0 0.0
    %385 = vmatpush.msra.mxu0 0.0
    %386 = vmatpush.msra.mxu0 0.0
    %387 = vmatpush.msra.mxu0 0.0
    %388 = vmatpush.msra.mxu0 %v335
    %389 = vmatpush.msra.mxu0 %v334
    %390 = vmatpush.msra.mxu0 %v333
    %391 = vmatpush.msra.mxu0 %v332
    %392 = vmatmul.f32.gmra.mxu0 %v371
    %v393 = vpop.f32.mrf.mxu0
    %v394 = vadd.f32 %v365, %v393
    %395 = vmatmul.f32.gmra.mxu0 %v374
    %v396 = vpop.f32.mrf.mxu0
    %v397 = vadd.f32 %v368, %v396
    %398 = vdwg.mxu0
    %v399 = vrot.slane %v324, 1
    %v400 = vrot.slane %v325, 1
    %v401 = vsel %vm213, %v399, %v400
    %v402 = vsel %vm213, %v400, %v399
    %v403 = vsel %vm220, %v401, 0.0
    %v404 = vsel %vm221, %v402, 0.0
    %s405 = scalar_lea.vmem [#allocation7], 64
    %v406 = vld [vmem:[%s405] sm:$0xff]
    %v407 = vld [vmem:[%s405 + $0x8] sm:$0xff]
    %v408 = vld [vmem:[%s405 + $0x10] sm:$0xff]
    %v409 = vld [vmem:[%s405 + $0x18] sm:$0xff]
    %v411 = vsel %vm152, %v403, 0
    %v414 = vsel %vm152, %v404, 0
    %416 = vmatpush.msra.mxu0 0.0
    %417 = vmatpush.msra.mxu0 0.0
    %418 = vmatpush.msra.mxu0 0.0
    %419 = vmatpush.msra.mxu0 0.0
    %420 = vmatpush.msra.mxu0 0.0
    %421 = vmatpush.msra.mxu0 0.0
    %422 = vmatpush.msra.mxu0 0.0
    %423 = vmatpush.msra.mxu0 0.0
    %424 = vmatpush.msra.mxu0 0.0
    %425 = vmatpush.msra.mxu0 0.0
    %426 = vmatpush.msra.mxu0 0.0
    %427 = vmatpush.msra.mxu0 0.0
    %428 = vmatpush.msra.mxu0 %v409
    %429 = vmatpush.msra.mxu0 %v408
    %430 = vmatpush.msra.mxu0 %v407
    %431 = vmatpush.msra.mxu0 %v406
    %432 = vmatmul.f32.gmra.mxu0 %v411
    %v433 = vpop.f32.mrf.mxu0
    %v434 = vadd.f32 0.0, %v433
    %435 = vmatmul.f32.gmra.mxu0 %v414
    %v436 = vpop.f32.mrf.mxu0
    %v437 = vadd.f32 0.0, %v436
    %438 = vdwg.mxu0
    %v439 = vadd.f32 %v394, %v434
    %v440 = vadd.f32 %v397, %v437
    %v441 = vperm.slane %v126, 0
    %v442 = vadd.f32 %v439, %v441
    %v443 = vadd.f32 %v440, %v441
    %v444 = vmax.f32 %v442, 0.0
    %v445 = vmax.f32 %v443, 0.0
    %v446 = vsel %vm152, %v444, 0.0
    %447 = vadd.xlane.f32.xlu0 %v446
    %v448 = vpop.xlane.xlu0 %447
    %v449 = vsel %vm152, %v445, 0.0
    %450 = vadd.xlane.f32.xlu0 %v449
    %v451 = vpop.xlane.xlu0 %450
    %v452 = vmul.f32 %v448, %v277
    %v453 = vmul.f32 %v451, %v277
    %v454 = vmul.f32 %v444, %v444
    %v455 = vmul.f32 %v445, %v445
    %v456 = vsel %vm152, %v454, 0.0
    %457 = vadd.xlane.f32.xlu0 %v456
    %v458 = vpop.xlane.xlu0 %457
    %v459 = vsel %vm152, %v455, 0.0
    %460 = vadd.xlane.f32.xlu0 %v459
    %v461 = vpop.xlane.xlu0 %460
    %v462 = vmul.f32 %v458, %v277
    %v463 = vmul.f32 %v461, %v277
    %v464 = vmul.f32 %v452, %v452
    %v465 = vmul.f32 %v453, %v453
    %v466 = vsub.f32 %v462, %v464
    %v467 = vsub.f32 %v463, %v465
    %v468 = vperm.slane %v127, 0
    %v469 = vmul.f32 %v444, %v468
    %v470 = vmul.f32 %v445, %v468
    %v471 = vsel %vm152, %v469, 0.0
    %472 = vadd.xlane.f32.xlu0 %v471
    %v473 = vpop.xlane.xlu0 %472
    %v474 = vsel %vm152, %v470, 0.0
    %475 = vadd.xlane.f32.xlu0 %v474
    %v476 = vpop.xlane.xlu0 %475
    %v477 = vstv %s129
    %v478 = vmul.f32 %v452, %v477
    %v479 = vmul.f32 %v453, %v477
    %v480 = vsub.f32 %v473, %v478
    %v481 = vsub.f32 %v476, %v479
    %v482 = vadd.f32 %v466, 1e-05
    %v483 = vadd.f32 %v467, 1e-05
    %v484 = vrsqrt.pop %v482
    %v485 = vmul.f32 %v484, %v482
    %v486 = vmul.f32 %v485, %v484
    %v487 = vmul.f32 0.5, %v486
    %v488 = vsub.f32 1.5, %v487
    %v489 = vmul.f32 %v484, %v488
    %vm490 = vweird.f32 %v482
    %vm491 = vweird.f32 %v484
    %vm492 = vmor %vm490, %vm491
    %v493 = vsel %vm492, %v484, %v489
    %v494 = vrsqrt.pop %v483
    %v495 = vmul.f32 %v494, %v483
    %v496 = vmul.f32 %v495, %v494
    %v497 = vmul.f32 0.5, %v496
    %v498 = vsub.f32 1.5, %v497
    %v499 = vmul.f32 %v494, %v498
    %vm500 = vweird.f32 %v483
    %vm501 = vweird.f32 %v494
    %vm502 = vmor %vm500, %vm501
    %v503 = vsel %vm502, %v494, %v499
    %v504 = vmul.f32 %v480, %v493
    %v505 = vmul.f32 %v481, %v503
    %v506 = vstv %s128
    %v507 = vadd.f32 %v504, %v506
    %v508 = vadd.f32 %v505, %v506
    %vm509 = vcmask 7168
    %510 = vst.msk [vmem:[%s5] sm:$0xff] %vm509, %v507
    %511 = vst.msk [vmem:[%s5 + $0x8] sm:$0xff] %vm509, %v508
    // Predicated region
    $region42: #{tpu_custom_call.1} parent=1 // pred_check
      _
    $region43: #{tpu_custom_call.1} parent=1 // pred_check_branch
      %513 = sbr.rel (0) target = $region45
    $region44: #{tpu_custom_call.1} parent=1 // pred_region
      _
    $region45: #{tpu_custom_call.1} parent=1 // pred_fallthru
      _
    // Predicated region
    $region46: #{tpu_custom_call.1} parent=1 // pred_check
      _
    $region47: #{tpu_custom_call.1} parent=1 // pred_check_branch
      %515 = sbr.rel (0) target = $region49
    $region48: #{tpu_custom_call.1} parent=1 // pred_region
      _
    $region49: #{tpu_custom_call.1} parent=1 // pred_fallthru
      _
    %516 = vsyncpa [#allocation3], 1
    %517 = vsyncpa [#allocation6], 1
    %518 = vsyncpa [#allocation9], 1
    %519 = vsyncpa [#allocation4], 1

</llo_original>
